<compile_context>
chip_gen: v5e
topology: v5e:2x2
jax: 0.10.0
libtpu: 0.0.40
codegen_flags: <defaults>
</compile_context>

<pallas_src>
import functools

import numpy as np

import jax
import jax.numpy as jnp
from jax import lax
from jax.experimental import pallas as pl
from jax.experimental.pallas import tpu as pltpu


# MXU operands are cast to this dtype (accumulation stays f32 via
# preferred_element_type); set to jnp.float32 for bit-parity with PyTorch.
MXU_DTYPE = jnp.bfloat16
NEG_INF = -1e30          # finite "masked edge" bias: keeps online softmax NaN-free


def _round_up(x, m):
    return ((x + m - 1) // m) * m


# ---------------------------------------------------------------------------
# Shared linear projection  z = h @ W   (fc_src == fc_dst, share_weights=True)
# ---------------------------------------------------------------------------
def _proj_kernel(h_ref, w_ref, z_ref):
    z_ref[...] = jnp.dot(h_ref[...].astype(MXU_DTYPE),
                         w_ref[...].astype(MXU_DTYPE),
                         preferred_element_type=jnp.float32)


def _project(h, w, *, tile_rows):
    n_pad, din = h.shape
    hf = w.shape[1]
    return pl.pallas_call(
        _proj_kernel,
        out_shape=jax.ShapeDtypeStruct((n_pad, hf), jnp.float32),
        grid=(n_pad // tile_rows,),
        in_specs=[pl.BlockSpec((tile_rows, din), lambda i: (i, 0)),
                  pl.BlockSpec((din, hf), lambda i: (0, 0))],
        out_specs=pl.BlockSpec((tile_rows, hf), lambda i: (i, 0)),
        compiler_params=pltpu.CompilerParams(
            dimension_semantics=("parallel",)),
    )(h, w)


# ---------------------------------------------------------------------------
# One GATv2 layer: tiled attention with online (flash-style) edge_softmax
# ---------------------------------------------------------------------------
def _gatv2_attn_kernel(z_dst_ref, z_src_ref, bias_ref, a_blk_ref, out_ref,
                       m_ref, l_ref, acc_ref, *,
                       num_heads, feat_per_head, negative_slope, apply_elu):
    s = pl.program_id(1)                      # src tile index (reduction axis)
    H, F = num_heads, feat_per_head

    @pl.when(s == 0)
    def _init():
        m_ref[...] = jnp.full_like(m_ref, NEG_INF)
        l_ref[...] = jnp.zeros_like(l_ref)
        acc_ref[...] = jnp.zeros_like(acc_ref)

    z_dst = z_dst_ref[...]                    # (td, H*F) f32, resident across src tiles
    z_src = z_src_ref[...]                    # (ts, H*F) f32
    bias = bias_ref[...]                      # (ts, td)  f32: 0 or NEG_INF
    ts, hf = z_src.shape
    td = z_dst.shape[0]

    # GATv2 pair scores, lane-dense on H*F; maximum-based leaky_relu.
    pair = z_src[:, None, :] + z_dst[None, :, :]            # (ts, td, H*F)
    act = jnp.maximum(pair, negative_slope * pair)

    # Per-head F-reduction on the MXU against the block-diagonal attn matrix;
    # the padded head columns are sliced off BEFORE the softmax.
    scores = jnp.dot(act.reshape(ts * td, hf).astype(MXU_DTYPE),
                     a_blk_ref[...].astype(MXU_DTYPE),
                     preferred_element_type=jnp.float32)     # (ts*td, Hp)
    scores = scores[:, :H].reshape(ts, td, H)
    scores = scores + bias[:, :, None]                       # additive edge mask

    # Online edge_softmax over incoming edges (the src axis).
    m_prev = m_ref[...]                                      # (td, H)
    m_new = jnp.maximum(m_prev, jnp.max(scores, axis=0))
    corr = jnp.exp(m_prev - m_new)                           # (td, H)
    p = jnp.exp(scores - m_new[None, :, :])                  # (ts, td, H)
    # Masked edges underflow to exactly 0 once a real (self-loop) edge has been
    # seen for the dst node; earlier all-masked contributions are zeroed by
    # `corr`.  Requires every real node to have >=1 in-edge (DGL enforces it;
    # the example adds self-loops).
    l_ref[...] = corr * l_ref[...] + jnp.sum(p, axis=0)
    m_ref[...] = m_new

    # Heads-batched MXU aggregation: out[v,h,:] += sum_u p[u,v,h] * z_src[u,h,:]
    # Statically unrolled over heads (a batched dot_general lowers to the same
    # per-head matmuls); replaces the old (N,N,H*F) alpha broadcast + VPU sum.
    p_b = p.astype(MXU_DTYPE)
    z_b = z_src.astype(MXU_DTYPE)
    for h in range(H):
        pv_h = lax.dot_general(p_b[:, :, h], z_b[:, h * F:(h + 1) * F],
                               (((0,), (0,)), ((), ())),
                               preferred_element_type=jnp.float32)   # (td, F)
        acc_ref[:, h * F:(h + 1) * F] = (
            corr[:, h:h + 1] * acc_ref[:, h * F:(h + 1) * F] + pv_h)

    @pl.when(s == pl.num_programs(1) - 1)
    def _finalize():
        # Exact reciprocal (approx=True deviates ~1e-3 from the reference
        # edge_softmax); max() guards padded / zero-in-degree dst nodes.
        inv_l = pl.reciprocal(jnp.maximum(l_ref[...], 1e-30), approx=False)
        for h in range(H):
            blk = acc_ref[:, h * F:(h + 1) * F] * inv_l[:, h:h + 1]
            if apply_elu:
                # ELU with a clamped exp argument (no inf in the dead branch).
                blk = jnp.where(blk > 0.0, blk,
                                jnp.exp(jnp.minimum(blk, 0.0)) - 1.0)
            out_ref[:, h * F:(h + 1) * F] = blk.astype(out_ref.dtype)


def _gatv2_layer(z, bias, a_blk, *, num_heads, feat_per_head, negative_slope,
                 apply_elu, tile_dst, tile_src):
    n_pad, hf = z.shape
    grid = (n_pad // tile_dst, n_pad // tile_src)
    kernel = functools.partial(
        _gatv2_attn_kernel, num_heads=num_heads, feat_per_head=feat_per_head,
        negative_slope=negative_slope, apply_elu=apply_elu)
    return pl.pallas_call(
        kernel,
        out_shape=jax.ShapeDtypeStruct((n_pad, hf), jnp.float32),
        grid=grid,
        in_specs=[
            pl.BlockSpec((tile_dst, hf), lambda d, s: (d, 0)),        # z (dst tile)
            pl.BlockSpec((tile_src, hf), lambda d, s: (s, 0)),        # z (src tile)
            pl.BlockSpec((tile_src, tile_dst), lambda d, s: (s, d)),  # edge bias
            pl.BlockSpec(a_blk.shape, lambda d, s: (0, 0)),           # attn block-diag
        ],
        out_specs=pl.BlockSpec((tile_dst, hf), lambda d, s: (d, 0)),
        scratch_shapes=[
            pltpu.VMEM((tile_dst, num_heads), jnp.float32),   # running max  m
            pltpu.VMEM((tile_dst, num_heads), jnp.float32),   # running sum  l
            pltpu.VMEM((tile_dst, hf), jnp.float32),          # output accumulator
        ],
        compiler_params=pltpu.CompilerParams(
            # dst tiles are independent (2 TCs on v7x can split them); the src
            # axis is the online-softmax reduction -> sequential and last.
            dimension_semantics=("parallel", "arbitrary"),
            vmem_limit_bytes=48 * 1024 * 1024,
        ),
    )(z, z, bias, a_blk)


# ---------------------------------------------------------------------------
# Encoder tail: mean over heads of the last layer, then graph MaxPooling
# ---------------------------------------------------------------------------
def _pool_kernel(logits_ref, mask_ref, out_ref, *, num_heads, out_feats, out_pad):
    logits = logits_ref[...]                                  # (n_pad, H*out)
    acc = logits[:, 0:out_feats]
    for h in range(1, num_heads):
        acc = acc + logits[:, h * out_feats:(h + 1) * out_feats]
    acc = acc * (1.0 / num_heads)
    masked = jnp.where(mask_ref[...] > 0.0, acc, NEG_INF)     # drop padded rows
    pooled = jnp.max(masked, axis=0, keepdims=True)           # (1, out_feats)
    pad = out_pad - out_feats
    if pad > 0:                                                # lane-dense store
        pooled = jnp.concatenate(
            [pooled, jnp.zeros((1, pad), jnp.float32)], axis=-1)
    out_ref[...] = pooled


def _head_mean_max_pool(logits, mask, *, num_heads, out_feats):
    out_pad = _round_up(out_feats, 128)
    kernel = functools.partial(_pool_kernel, num_heads=num_heads,
                               out_feats=out_feats, out_pad=out_pad)
    vmem = pltpu.MemorySpace.VMEM
    pooled = pl.pallas_call(
        kernel,
        out_shape=jax.ShapeDtypeStruct((1, out_pad), jnp.float32),
        in_specs=[pl.BlockSpec(memory_space=vmem),
                  pl.BlockSpec(memory_space=vmem)],
        out_specs=pl.BlockSpec(memory_space=vmem),
    )(logits, mask)
    return pooled[:, :out_feats]


# ---------------------------------------------------------------------------
# Host-side parameter prep + full forward
# ---------------------------------------------------------------------------
def _build_attn_block(attn, head_pad=8):
    """(H, F) attn weights -> (H*F, Hp) block-diagonal score-reduction matrix."""
    attn = np.asarray(attn, dtype=np.float32)
    nh, f = attn.shape
    hp = max(nh, head_pad)    # keep the matmul N-dim non-degenerate; the padded
    a_blk = np.zeros((nh * f, hp), np.float32)   # heads are sliced off pre-softmax.
    for h in range(nh):
        a_blk[h * f:(h + 1) * f, h] = attn[h]
    return jnp.asarray(a_blk)


def gat_encoder_forward(x, adj, params, heads_per_layer, out_feats_per_layer,
                        negative_slope=0.2):
    """Mirrors GATEncoder.forward(g, x) (eval mode) with tiled Pallas kernels."""
    n = x.shape[0]
    num_layers = len(params)

    # dst/src node tiles sized so the live pair-phase data stays ~20 MiB
    # (v7x 64 MiB physical VMEM is the binding constraint); one tile if the
    # whole (padded) graph fits.
    if n <= 128:
        tile_dst = tile_src = _round_up(n, 8)
        n_pad = tile_dst
    else:
        tile_dst, tile_src = 128, 64
        n_pad = _round_up(n, 128)

    # Pad node features; precompute the additive edge-mask bias ONCE (shared by
    # every layer). Padded rows/cols are fully masked.
    x_pad = jnp.zeros((n_pad, x.shape[1]), jnp.float32).at[:n].set(
        x.astype(jnp.float32))
    bias = jnp.full((n_pad, n_pad), NEG_INF, jnp.float32)
    bias = bias.at[:n, :n].set((adj.astype(jnp.float32) - 1.0) * 1e30)
    row_mask = jnp.zeros((n_pad, 1), jnp.float32).at[:n].set(1.0)

    h = x_pad
    for li, (w, attn) in enumerate(params):
        a_blk = _build_attn_block(attn)
        z = _project(h, jnp.asarray(w, jnp.float32), tile_rows=tile_dst)
        h = _gatv2_layer(
            z, bias, a_blk,
            num_heads=heads_per_layer[li],
            feat_per_head=out_feats_per_layer[li],
            negative_slope=negative_slope,
            apply_elu=(li < num_layers - 1),
            tile_dst=tile_dst, tile_src=tile_src)

    return _head_mean_max_pool(h, row_mask,
                               num_heads=heads_per_layer[-1],
                               out_feats=out_feats_per_layer[-1])


if __name__ == "__main__":
    key = jax.random.PRNGKey(0)

    N = 16                      # nodes in the graph
    in_dim, hidden_dim, out_dim = 16, 32, 16
    heads = [8, 8, 1]
    num_layers = 3

    k_x, k_adj, *k_params = jax.random.split(key, 2 + 2 * num_layers)
    x = jax.random.normal(k_x, (N, in_dim), dtype=jnp.float32)

    # Random directed graph; self loops guarantee every node has an in-edge.
    adj = (jax.random.uniform(k_adj, (N, N)) < 0.4).astype(jnp.float32)
    adj = jnp.maximum(adj, jnp.eye(N, dtype=jnp.float32))

    # Layer configs exactly as GATEncoder.__init__ builds them.
    layer_cfg = [
        (in_dim, hidden_dim, heads[0]),
        (hidden_dim * heads[1], hidden_dim, heads[0]),
        (hidden_dim * heads[-2], out_dim, heads[-1]),
    ]

    params = []
    for idx, (din, dout, nh) in enumerate(layer_cfg):
        kw, ka = k_params[2 * idx], k_params[2 * idx + 1]
        w_scale = (2.0 / (din + nh * dout)) ** 0.5
        a_scale = (2.0 / (dout + 1)) ** 0.5
        W = w_scale * jax.random.normal(kw, (din, nh * dout), dtype=jnp.float32)
        A = a_scale * jax.random.normal(ka, (nh, dout), dtype=jnp.float32)
        params.append((W, A))

    heads_per_layer = [c[2] for c in layer_cfg]
    out_feats_per_layer = [c[1] for c in layer_cfg]

    out = gat_encoder_forward(x, adj, params, heads_per_layer, out_feats_per_layer)
    out = jax.block_until_ready(out)
    assert out.shape == (1, out_dim) and bool(jnp.all(jnp.isfinite(out)))
    print("KERNEL_OK")
</pallas_src>

<mosaic_0001>
module attributes {stable_mosaic.version = 11 : i64} {
  func.func @_proj_kernel(%arg0: i32, %arg1: memref<16x16xf32, #tpu.memory_space<vmem>>, %arg2: memref<16x256xf32, #tpu.memory_space<vmem>>, %arg3: memref<16x256xf32, #tpu.memory_space<vmem>>) attributes {dimension_semantics = [#tpu.dimension_semantics<parallel>], iteration_bounds = array<i64: 1>, scalar_prefetch = 0 : i64, scratch_operands = 0 : i64, tpu.core_type = #tpu.core_type<tc>, window_params = [{transform_indices = @transform_0, window_bounds = array<i64: 16, 16>}, {pipeline_mode = #tpu.pipeline_mode<synchronous>, transform_indices = @transform_1, window_bounds = array<i64: 16, 256>}, {transform_indices = @transform_2, window_bounds = array<i64: 16, 256>}]} {
    %c0 = arith.constant 0 : index
    %c0_0 = arith.constant 0 : index
    %0 = vector.load %arg1[%c0, %c0_0] : memref<16x16xf32, #tpu.memory_space<vmem>>, vector<16x16xf32>
    %1 = arith.truncf %0 : vector<16x16xf32> to vector<16x16xbf16>
    %c0_1 = arith.constant 0 : index
    %c0_2 = arith.constant 0 : index
    %2 = vector.load %arg2[%c0_1, %c0_2] : memref<16x256xf32, #tpu.memory_space<vmem>>, vector<16x256xf32>
    %3 = arith.truncf %2 : vector<16x256xf32> to vector<16x256xbf16>
    %cst = arith.constant dense<0.000000e+00> : vector<16x256xf32>
    %4 = tpu.matmul %1, %3, %cst {dimension_numbers = #tpu.dot_dimension_numbers<[1], [0], [0], [1], [0, 0, 1, 1], [], []>} : vector<16x16xbf16>, vector<16x256xbf16>, vector<16x256xf32> -> vector<16x256xf32>
    %c0_3 = arith.constant 0 : index
    %c0_4 = arith.constant 0 : index
    %5 = vector.load %arg3[%c0_3, %c0_4] : memref<16x256xf32, #tpu.memory_space<vmem>>, vector<16x256xf32>
    tpu.vector_store %arg3[%c0_3, %c0_4], %4 {strides = array<i32>} : memref<16x256xf32, #tpu.memory_space<vmem>>, vector<16x256xf32>,
    return
  }
  func.func @transform_0(%arg0: i32) -> (i32, i32) {
    %c0_i32 = arith.constant 0 : i32
    %c0_i32_0 = arith.constant 0 : i32
    return %arg0, %c0_i32 : i32, i32
  }
  func.func @transform_1(%arg0: i32) -> (i32, i32) {
    %c0_i32 = arith.constant 0 : i32
    %c0_i32_0 = arith.constant 0 : i32
    %c0_i32_1 = arith.constant 0 : i32
    return %c0_i32, %c0_i32_0 : i32, i32
  }
  func.func @transform_2(%arg0: i32) -> (i32, i32) {
    %c0_i32 = arith.constant 0 : i32
    %c0_i32_0 = arith.constant 0 : i32
    return %arg0, %c0_i32 : i32, i32
  }
}

</mosaic_0001>

<llo_original>
// kernel: tpu_custom_call.1
$region0: #{tpu_custom_call.1}
  #allocation0 [shape = 'u32[]', space=smem, size = 0x4, offset = 0x4, fixed_abs, tag = 'smem constant byte address 0x4 - core index']
  #allocation1 [shape = 'u32[72,128]{1,0:T(1,128)}', space=vmem, size = 0x9000, scoped, tag = 'internal scratch']
  %s0 = inlined_call_operand.hbm [shape: f32[16,16], index: 0, kind: input, shape index: {}]
  %s1 = inlined_call_operand.hbm [shape: f32[16,256], index: 1, kind: input, shape index: {}]
  %s2 = inlined_call_operand.hbm [shape: f32[16,256], index: 2, kind: output, shape index: {}]
  %s3 = sld [smem:[#allocation0]]
  $region26: #{tpu_custom_call.1} parent=0
    _
  %s5 = ssub.s32 1, %s3
  %s6 = scalar_select 0, %s5, %s3
  $region1: #{tpu_custom_call.1} parent=0
    #allocation2 [shape = 'u8[8192]{0}', space=vmem, size = 0x2000, scoped, tag = 'input window, operand 0, single buffered']
    #allocation3 [shape = 's32[1]{0}', space=sflag, size = 0x4, scoped, tag = 'scoped memory for tpu_custom_call.1']
    #allocation4 [shape = 's32[1]{0}', space=sflag, size = 0x4, scoped, tag = 'scoped memory for tpu_custom_call.1']
    #allocation5 [shape = 'u8[16384]{0}', space=vmem, size = 0x4000, scoped, tag = 'input window, operand 1, single buffered']
    #allocation6 [shape = 's32[1]{0}', space=sflag, size = 0x4, scoped, tag = 'scoped memory for tpu_custom_call.1']
    #allocation7 [shape = 'u8[16384]{0}', space=vmem, size = 0x4000, scoped, tag = 'output window, operand 0, single buffered']
    %7 = vsyncpa [#allocation3], 0
    %8 = vsyncpa [#allocation6], 0
    %9 = vsyncpa [#allocation4], 0
    // Predicated region
    $region2: #{tpu_custom_call.1} parent=1 // pred_check
      _
    $region3: #{tpu_custom_call.1} parent=1 // pred_check_branch
      %11 = sbr.rel (0) target = $region5
    $region4: #{tpu_custom_call.1} parent=1 // pred_region
      %13 = vsyncadd [#allocation3], 0
      %s14 = sshll.u32 %s0, 4
      %s15 = int_to_ptr.hbm [resolvable:$true] %s14
      %s16 = sshll.u32 [#allocation2], 4
      %s17 = int_to_ptr.vmem [resolvable:$true] %s16
      %22 = dma.hbm_to_vmem [thread:$0]  %s15, 256, %s17, [#allocation3], 128, 128, 8
    $region5: #{tpu_custom_call.1} parent=1 // pred_fallthru
      _
    // Predicated region
    $region6: #{tpu_custom_call.1} parent=1 // pred_check
      _
    $region7: #{tpu_custom_call.1} parent=1 // pred_check_branch
      %24 = sbr.rel (0) target = $region9
    $region8: #{tpu_custom_call.1} parent=1 // pred_region
      %26 = vsyncadd [#allocation6], 0
      %s27 = sshll.u32 %s1, 4
      %s28 = int_to_ptr.hbm [resolvable:$true] %s27
      %s29 = sshll.u32 [#allocation5], 4
      %s30 = int_to_ptr.vmem [resolvable:$true] %s29
      %35 = dma.hbm_to_vmem [thread:$0]  %s28, 512, %s30, [#allocation6], 256, 256, 16
    $region9: #{tpu_custom_call.1} parent=1 // pred_fallthru
      _
    // Predicated region
    $region10: #{tpu_custom_call.1} parent=1 // pred_check
      _
    $region11: #{tpu_custom_call.1} parent=1 // pred_check_branch
      %37 = sbr.rel (0) target = $region13
    $region12: #{tpu_custom_call.1} parent=1 // pred_region
      %39 = dma.done [#allocation3], 256
    $region13: #{tpu_custom_call.1} parent=1 // pred_fallthru
      _
    // Predicated region
    $region14: #{tpu_custom_call.1} parent=1 // pred_check
      _
    $region15: #{tpu_custom_call.1} parent=1 // pred_check_branch
      %41 = sbr.rel (0) target = $region17
    $region16: #{tpu_custom_call.1} parent=1 // pred_region
      %43 = dma.done [#allocation6], 512
    $region17: #{tpu_custom_call.1} parent=1 // pred_fallthru
      _
    %v45 = vld [vmem:[#allocation2] sm:$0xff]
    %v46 = vld [vmem:[#allocation2 + $0x8] sm:$0xff]
    %v47 = vpack.c.bf16 %v46, %v45
    %v48 = vld [vmem:[#allocation5] sm:$0xff]
    %v49 = vld [vmem:[#allocation5 + $0x8] sm:$0xff]
    %v50 = vld [vmem:[#allocation5 + $0x10] sm:$0xff]
    %v51 = vld [vmem:[#allocation5 + $0x18] sm:$0xff]
    %v52 = vpack.c.bf16 %v50, %v48
    %v53 = vpack.c.bf16 %v51, %v49
    %vm54 = vcmask 130048
    %v56 = vsel %vm54, %v47, 0
    %58 = vmatpush.bf16.msra.mxu0 0
    %59 = vmatpush.bf16.msra.mxu0 0
    %60 = vmatpush.bf16.msra.mxu0 0
    %61 = vmatpush.bf16.msra.mxu0 0
    %62 = vmatpush.bf16.msra.mxu0 0
    %63 = vmatpush.bf16.msra.mxu0 0
    %64 = vmatpush.bf16.msra.mxu0 0
    %65 = vmatpush.bf16.msra.mxu0 %v52
    %66 = vmatmul.bf16.gmra.mxu0 %v56
    %v67 = vpop.f32.mrf.mxu0
    %v68 = vadd.f32 0.0, %v67
    %v69 = vpop.f32.mrf.mxu0
    %v70 = vadd.f32 0.0, %v69
    %71 = vdwg.mxu0
    %72 = vmatpush.bf16.msra.mxu0 0
    %73 = vmatpush.bf16.msra.mxu0 0
    %74 = vmatpush.bf16.msra.mxu0 0
    %75 = vmatpush.bf16.msra.mxu0 0
    %76 = vmatpush.bf16.msra.mxu0 0
    %77 = vmatpush.bf16.msra.mxu0 0
    %78 = vmatpush.bf16.msra.mxu0 0
    %79 = vmatpush.bf16.msra.mxu0 %v53
    %80 = vmatmul.bf16.gmra.mxu0 %v56
    %v81 = vpop.f32.mrf.mxu0
    %v82 = vadd.f32 0.0, %v81
    %v83 = vpop.f32.mrf.mxu0
    %v84 = vadd.f32 0.0, %v83
    %85 = vdwg.mxu0
    %86 = vst [vmem:[#allocation7] sm:$0xff] %v68
    %87 = vst [vmem:[#allocation7 + $0x8] sm:$0xff] %v82
    %88 = vst [vmem:[#allocation7 + $0x10] sm:$0xff] %v70
    %89 = vst [vmem:[#allocation7 + $0x18] sm:$0xff] %v84
    // Predicated region
    $region18: #{tpu_custom_call.1} parent=1 // pred_check
      _
    $region19: #{tpu_custom_call.1} parent=1 // pred_check_branch
      %91 = sbr.rel (0) target = $region21
    $region20: #{tpu_custom_call.1} parent=1 // pred_region
      %93 = vsyncadd [#allocation4], 0
      %s94 = sshll.u32 [#allocation7], 4
      %s95 = int_to_ptr.vmem [resolvable:$true] %s94
      %s96 = sshll.u32 %s2, 4
      %s97 = int_to_ptr.hbm [resolvable:$true] %s96
      %102 = dma.vmem_to_hbm [thread:$0]  %s95, 512, %s97, [#allocation4], 256, 256, 16
    $region21: #{tpu_custom_call.1} parent=1 // pred_fallthru
      _
    // Predicated region
    $region22: #{tpu_custom_call.1} parent=1 // pred_check
      _
    $region23: #{tpu_custom_call.1} parent=1 // pred_check_branch
      %104 = sbr.rel (0) target = $region25
    $region24: #{tpu_custom_call.1} parent=1 // pred_region
      %106 = dma.done [#allocation4], 512
    $region25: #{tpu_custom_call.1} parent=1 // pred_fallthru
      _
    %107 = vsyncpa [#allocation3], 1
    %108 = vsyncpa [#allocation6], 1
    %109 = vsyncpa [#allocation4], 1

</llo_original>
